<compile_context>
chip_gen: v5e
topology: v5e:2x2
jax: 0.10.0
libtpu: 0.0.40
codegen_flags: <defaults>
</compile_context>

<pallas_src>
import functools
import math

import jax
import jax.numpy as jnp
from jax import lax
from jax.experimental import pallas as pl
from jax.experimental.pallas import tpu as pltpu


# ----------------------------------------------------------------------------
# Kernel bodies
# ----------------------------------------------------------------------------
def _gabor_rows(gx_ref, gy_ref, ew_ref, *, tile_h, H, W, inv_h, inv_w):
    """Edge-folded 1-D Gabor rows: gabor_x (W, E), gabor_y (tile_h, E)."""
    gx = gx_ref[...]            # (4, E) f32
    gy = gy_ref[...]            # (4, E) f32
    ew = ew_ref[...]            # (4, E) f32
    E = gx.shape[-1]

    # ---- x rows (full grid width; (W, E) work, recomputed per H-tile) -----
    w_ids = lax.broadcasted_iota(jnp.int32, (W, E), 0)
    xw = w_ids.astype(jnp.float32) * inv_w                     # x in [0, 1]
    # exp(-x^2) ** a == exp(-x^2 * a) for this positive base.
    gabor_x = (jnp.exp(-(xw * xw) * gx[0:1, :])
               * jnp.cos(gx[1:2, :] * xw + gx[2:3, :])
               * gx[3:4, :])                                   # (W, E)
    # Fold the W-edge weights into rows 0 and W-1 (1-D work, not (H,W,E)).
    gabor_x = (gabor_x
               + jnp.where(w_ids == 0, ew[2:3, :], 0.0)
               + jnp.where(w_ids == W - 1, ew[3:4, :], 0.0))

    # ---- y rows for this H tile -------------------------------------------
    r = (lax.broadcasted_iota(jnp.int32, (tile_h, E), 0)
         + pl.program_id(0) * tile_h)                          # global row id
    yh = r.astype(jnp.float32) * inv_h
    gabor_y = (jnp.exp(-(yh * yh) * gy[0:1, :])
               * jnp.cos(gy[1:2, :] * yh + gy[2:3, :])
               * gy[3:4, :])                                   # (tile_h, E)
    gabor_y = (gabor_y
               + jnp.where(r == 0, ew[0:1, :], 0.0)
               + jnp.where(r == H - 1, ew[1:2, :], 0.0))
    return gabor_x, gabor_y


def gabor_kernel(gx_ref, gy_ref, ew_ref, out_ref, *,
                 tile_h, H, W, inv_h, inv_w):
    gabor_x, gabor_y = _gabor_rows(gx_ref, gy_ref, ew_ref, tile_h=tile_h,
                                   H=H, W=W, inv_h=inv_h, inv_w=inv_w)
    # Single broadcast add, written straight to the output block:
    # exactly one vector store per output element.
    out_ref[...] = gabor_y[:, None, :] + gabor_x[None, :, :]


def gabor_proj_kernel(gx_ref, gy_ref, ew_ref, wp_ref, bp_ref, out_ref, *,
                      tile_h, H, W, inv_h, inv_w):
    gabor_x, gabor_y = _gabor_rows(gx_ref, gy_ref, ew_ref, tile_h=tile_h,
                                   H=H, W=W, inv_h=inv_h, inv_w=inv_w)
    # Project the 1-D rows instead of the (H, W, E) volume (the projection is
    # linear, so it distributes over the separable sum).  Matmuls are
    # (W, E) @ (E, P) and (tile_h, E) @ (E, P) -- tiny.
    px = jnp.dot(gabor_x, wp_ref[...],
                 preferred_element_type=jnp.float32) + bp_ref[...]   # (W, P)
    py = jnp.dot(gabor_y, wp_ref[...],
                 preferred_element_type=jnp.float32)                 # (tile_h, P)
    out_ref[...] = py[:, None, :] + px[None, :, :]


# ----------------------------------------------------------------------------
# Wrapper (parameter plumbing + pallas_call)
# ----------------------------------------------------------------------------
def _pick_tile_h(H, W, e_out, tile_h=None):
    """H tile: full H when small, else sized for ~2 MiB f32 output tiles."""
    if tile_h is not None:
        return max(1, min(int(tile_h), H))
    if H <= 8:
        return H
    rows = (2 * 1024 * 1024) // max(1, W * e_out * 4)
    if rows >= 8:
        rows = (rows // 8) * 8       # sublane-friendly, though not required
    rows = max(1, min(rows, H))
    return rows


def gabor_position_embeddings(gabor_x, gabor_y, edge_weights,
                              grid_height, grid_width,
                              proj_w_t=None, proj_b=None, tile_h=None):
    """Forward of GaborPositionEmbeddings.

    Returns (1, H, W, E) float32, or (1, H, W, P) when projection weights are
    given (proj_w_t = Linear.weight.T with shape (E, P), proj_b shape (P,) or
    (1, P)).
    """
    E = gabor_x.shape[-1]
    H, W = int(grid_height), int(grid_width)

    gx = gabor_x.reshape(4, E).astype(jnp.float32)
    gy = gabor_y.reshape(4, E).astype(jnp.float32)
    ew = edge_weights.reshape(4, E).astype(jnp.float32)

    # torch.linspace(0, 1, n): step = 1 / (n - 1); degenerate n == 1 -> 0.
    inv_w = 1.0 / (W - 1) if W > 1 else 0.0
    inv_h = 1.0 / (H - 1) if H > 1 else 0.0

    e_out = E if proj_w_t is None else int(proj_w_t.shape[-1])
    th = _pick_tile_h(H, W, e_out, tile_h)
    n_tiles = int(pl.cdiv(H, th))

    common = dict(tile_h=th, H=H, W=W, inv_h=inv_h, inv_w=inv_w)
    param_spec = pl.BlockSpec((4, E), lambda i: (0, 0))
    out_spec = pl.BlockSpec((th, W, e_out), lambda i: (i, 0, 0))
    out_shape = jax.ShapeDtypeStruct((H, W, e_out), jnp.float32)

    row_elems = W * E * n_tiles + H * E        # 1-D Gabor rows built in-kernel
    proj_flops = 0 if proj_w_t is None else 2 * (H + W * n_tiles) * E * e_out
    proj_bytes = 0 if proj_w_t is None else 4 * (E * e_out + e_out)
    cost = pl.CostEstimate(
        flops=int(H * W * e_out + 10 * row_elems + proj_flops),
        transcendentals=int(2 * row_elems),
        bytes_accessed=int(4 * (H * W * e_out + 3 * 4 * E) + proj_bytes),
    )
    compiler_params = pltpu.CompilerParams(
        dimension_semantics=("parallel",),      # H tiles are independent
        vmem_limit_bytes=48 * 1024 * 1024,      # headroom at large H*W*E
    )

    if proj_w_t is None:
        out = pl.pallas_call(
            functools.partial(gabor_kernel, **common),
            out_shape=out_shape,
            grid=(n_tiles,),
            in_specs=[param_spec, param_spec, param_spec],
            out_specs=out_spec,
            compiler_params=compiler_params,
            cost_estimate=cost,
        )(gx, gy, ew)
    else:
        P = e_out
        wp = proj_w_t.reshape(E, P).astype(jnp.float32)
        bp = (jnp.zeros((1, P), jnp.float32) if proj_b is None
              else jnp.asarray(proj_b, jnp.float32).reshape(1, P))
        out = pl.pallas_call(
            functools.partial(gabor_proj_kernel, **common),
            out_shape=out_shape,
            grid=(n_tiles,),
            in_specs=[param_spec, param_spec, param_spec,
                      pl.BlockSpec((E, P), lambda i: (0, 0)),
                      pl.BlockSpec((1, P), lambda i: (0, 0))],
            out_specs=out_spec,
            compiler_params=compiler_params,
            cost_estimate=cost,
        )(gx, gy, ew, wp, bp)

    return out[None]  # unsqueeze(0)


# ----------------------------------------------------------------------------
# Pure-JAX reference (mirrors the PyTorch forward exactly)
# ----------------------------------------------------------------------------
def reference(gabor_x, gabor_y, edge_weights, grid_height, grid_width,
              proj_w_t=None, proj_b=None):
    W, H = grid_width, grid_height
    gx = gabor_x.reshape(4, -1)
    gy = gabor_y.reshape(4, -1)
    x = jnp.linspace(0.0, 1.0, W, dtype=jnp.float32).reshape(W, 1)
    y = jnp.linspace(0.0, 1.0, H, dtype=jnp.float32).reshape(H, 1)
    gab_x = jnp.exp(-x ** 2) ** gx[0] * jnp.cos(gx[1] * x + gx[2]) * gx[3]
    gab_y = jnp.exp(-y ** 2) ** gy[0] * jnp.cos(gy[1] * y + gy[2]) * gy[3]
    pos = gab_x[None, :, :] + gab_y[:, None, :]
    pos = pos.at[0, :].add(edge_weights[0])
    pos = pos.at[-1, :].add(edge_weights[1])
    pos = pos.at[:, 0].add(edge_weights[2])
    pos = pos.at[:, -1].add(edge_weights[3])
    if proj_w_t is not None:
        pos = pos @ proj_w_t + jnp.asarray(proj_b).reshape(-1)
    return pos[None]


# ----------------------------------------------------------------------------
# Demo
# ----------------------------------------------------------------------------
if __name__ == "__main__":
    key = jax.random.PRNGKey(0)
    k1, k2, k3, k4, k5 = jax.random.split(key, 5)

    def make_params(embedding_dim, projection_size):
        init_mean = jnp.array([2.0, 10.0 * 2.0 * math.pi, 0.0, 0.0],
                              dtype=jnp.float32).reshape(4, 1, 1)
        init_radius = jnp.array([2.0, 10.0 * 2.0 * math.pi, math.pi, 1.0],
                                dtype=jnp.float32).reshape(4, 1, 1)
        g_x = (jax.random.uniform(k1, (4, 1, embedding_dim),
                                  minval=-1.0, maxval=1.0) * init_mean
               + init_radius)
        g_y = (jax.random.uniform(k2, (4, 1, embedding_dim),
                                  minval=-1.0, maxval=1.0) * init_mean
               + init_radius)
        e_w = jax.random.uniform(k3, (4, embedding_dim),
                                 minval=-1.0, maxval=1.0)
        bound = 1.0 / math.sqrt(embedding_dim)
        w_t = jax.random.uniform(k4, (embedding_dim, projection_size),
                                 minval=-bound, maxval=bound)   # W^T of Linear
        b = jax.random.uniform(k5, (1, projection_size),
                               minval=-bound, maxval=bound)
        return g_x, g_y, e_w, w_t, b

    # Tolerances: the kernel builds coordinates with iota * 1/(n-1) (vs the
    # reference's linspace) and uses exp(-x^2*a) / a distributed projection;
    # the ~1-ulp coordinate difference is amplified by the ~20*pi Gabor
    # frequencies, so differences of a few 1e-5 are expected in fp32.
    RTOL = ATOL = 2e-4

    # Case 1: lane-dense embedding dim (realistic), no projection, 1 H-tile.
    H, W, E, P = 16, 16, 128, 128
    g_x, g_y, e_w, w_t, b = make_params(E, P)
    out = jax.block_until_ready(gabor_position_embeddings(g_x, g_y, e_w, H, W))
    ref = reference(g_x, g_y, e_w, H, W)
    assert out.shape == (1, H, W, E)
    assert jnp.allclose(out, ref, rtol=RTOL, atol=ATOL)

    # Case 2: projection path, forced multi-tile grid over H (grid=(2,)).
    out_p = jax.block_until_ready(
        gabor_position_embeddings(g_x, g_y, e_w, H, W,
                                  proj_w_t=w_t, proj_b=b, tile_h=8))
    ref_p = reference(g_x, g_y, e_w, H, W, proj_w_t=w_t, proj_b=b)
    assert out_p.shape == (1, H, W, P)
    assert jnp.allclose(out_p, ref_p, rtol=RTOL, atol=ATOL)

    # Case 3: small / lane-thin embedding dim (original demo scale) still works.
    H2, W2, E2 = 8, 16, 32
    g_x2, g_y2, e_w2, _, _ = make_params(E2, E2)
    out_s = jax.block_until_ready(
        gabor_position_embeddings(g_x2, g_y2, e_w2, H2, W2))
    ref_s = reference(g_x2, g_y2, e_w2, H2, W2)
    assert out_s.shape == (1, H2, W2, E2)
    assert jnp.allclose(out_s, ref_s, rtol=RTOL, atol=ATOL)

    print("KERNEL_OK")
</pallas_src>

<mosaic_0001>
module attributes {stable_mosaic.version = 11 : i64} {
  func.func @gabor_kernel(%arg0: i32, %arg1: memref<4x128xf32, #tpu.memory_space<vmem>>, %arg2: memref<4x128xf32, #tpu.memory_space<vmem>>, %arg3: memref<4x128xf32, #tpu.memory_space<vmem>>, %arg4: memref<16x16x128xf32, #tpu.memory_space<vmem>>) attributes {dimension_semantics = [#tpu.dimension_semantics<parallel>], iteration_bounds = array<i64: 1>, scalar_prefetch = 0 : i64, scratch_operands = 0 : i64, tpu.core_type = #tpu.core_type<tc>, window_params = [{pipeline_mode = #tpu.pipeline_mode<synchronous>, transform_indices = @transform_0, window_bounds = array<i64: 4, 128>}, {pipeline_mode = #tpu.pipeline_mode<synchronous>, transform_indices = @transform_1, window_bounds = array<i64: 4, 128>}, {pipeline_mode = #tpu.pipeline_mode<synchronous>, transform_indices = @transform_2, window_bounds = array<i64: 4, 128>}, {transform_indices = @transform_3, window_bounds = array<i64: 16, 16, 128>}]} {
    %c0 = arith.constant 0 : index
    %c0_0 = arith.constant 0 : index
    %0 = vector.load %arg1[%c0, %c0_0] : memref<4x128xf32, #tpu.memory_space<vmem>>, vector<4x128xf32>
    %c0_1 = arith.constant 0 : index
    %c0_2 = arith.constant 0 : index
    %1 = vector.load %arg2[%c0_1, %c0_2] : memref<4x128xf32, #tpu.memory_space<vmem>>, vector<4x128xf32>
    %c0_3 = arith.constant 0 : index
    %c0_4 = arith.constant 0 : index
    %2 = vector.load %arg3[%c0_3, %c0_4] : memref<4x128xf32, #tpu.memory_space<vmem>>, vector<4x128xf32>
    %3 = tpu.iota {dimensions = array<i32: 0>} : vector<16x128xi32>
    %4 = arith.sitofp %3 : vector<16x128xi32> to vector<16x128xf32>
    %cst = arith.constant 0.0666666701 : f32
    %5 = vector.broadcast %cst : f32 to vector<16x128xf32>
    %6 = arith.mulf %4, %5 : vector<16x128xf32>
    %7 = arith.mulf %6, %6 : vector<16x128xf32>
    %cst_5 = arith.constant 0.000000e+00 : f32
    %8 = vector.broadcast %cst_5 : f32 to vector<16x128xf32>
    %9 = arith.subf %8, %7 : vector<16x128xf32>
    %10 = vector.extract_strided_slice %0 {offsets = [0, 0], sizes = [1, 128], strides = [1, 1]} : vector<4x128xf32> to vector<1x128xf32>
    %11 = vector.broadcast %10 : vector<1x128xf32> to vector<16x128xf32>
    %12 = arith.mulf %9, %11 : vector<16x128xf32>
    %13 = math.exp %12 : vector<16x128xf32>
    %14 = vector.extract_strided_slice %0 {offsets = [1, 0], sizes = [1, 128], strides = [1, 1]} : vector<4x128xf32> to vector<1x128xf32>
    %15 = vector.broadcast %14 : vector<1x128xf32> to vector<16x128xf32>
    %16 = arith.mulf %15, %6 : vector<16x128xf32>
    %17 = vector.extract_strided_slice %0 {offsets = [2, 0], sizes = [1, 128], strides = [1, 1]} : vector<4x128xf32> to vector<1x128xf32>
    %18 = vector.broadcast %17 : vector<1x128xf32> to vector<16x128xf32>
    %19 = arith.addf %16, %18 : vector<16x128xf32>
    %20 = math.cos %19 : vector<16x128xf32>
    %21 = arith.mulf %13, %20 : vector<16x128xf32>
    %22 = vector.extract_strided_slice %0 {offsets = [3, 0], sizes = [1, 128], strides = [1, 1]} : vector<4x128xf32> to vector<1x128xf32>
    %23 = vector.broadcast %22 : vector<1x128xf32> to vector<16x128xf32>
    %24 = arith.mulf %21, %23 : vector<16x128xf32>
    %c0_i32 = arith.constant 0 : i32
    %25 = vector.broadcast %c0_i32 : i32 to vector<16x128xi32>
    %26 = arith.cmpi eq, %3, %25 : vector<16x128xi32>
    %27 = vector.extract_strided_slice %2 {offsets = [2, 0], sizes = [1, 128], strides = [1, 1]} : vector<4x128xf32> to vector<1x128xf32>
    %cst_6 = arith.constant 0.000000e+00 : f32
    %28 = vector.shape_cast %27 : vector<1x128xf32> to vector<1x128xf32>
    %29 = vector.broadcast %28 : vector<1x128xf32> to vector<16x128xf32>
    %30 = vector.broadcast %cst_6 : f32 to vector<16x128xf32>
    %31 = arith.select %26, %29, %30 : vector<16x128xi1>, vector<16x128xf32>
    %32 = arith.addf %24, %31 : vector<16x128xf32>
    %c15_i32 = arith.constant 15 : i32
    %33 = vector.broadcast %c15_i32 : i32 to vector<16x128xi32>
    %34 = arith.cmpi eq, %3, %33 : vector<16x128xi32>
    %35 = vector.extract_strided_slice %2 {offsets = [3, 0], sizes = [1, 128], strides = [1, 1]} : vector<4x128xf32> to vector<1x128xf32>
    %cst_7 = arith.constant 0.000000e+00 : f32
    %36 = vector.shape_cast %35 : vector<1x128xf32> to vector<1x128xf32>
    %37 = vector.broadcast %36 : vector<1x128xf32> to vector<16x128xf32>
    %38 = vector.broadcast %cst_7 : f32 to vector<16x128xf32>
    %39 = arith.select %34, %37, %38 : vector<16x128xi1>, vector<16x128xf32>
    %40 = arith.addf %32, %39 : vector<16x128xf32>
    %41 = tpu.iota {dimensions = array<i32: 0>} : vector<16x128xi32>
    %c16_i32 = arith.constant 16 : i32
    %42 = arith.muli %arg0, %c16_i32 : i32
    %43 = vector.broadcast %42 : i32 to vector<16x128xi32>
    %44 = arith.addi %41, %43 : vector<16x128xi32>
    %45 = arith.sitofp %44 : vector<16x128xi32> to vector<16x128xf32>
    %cst_8 = arith.constant 0.0666666701 : f32
    %46 = vector.broadcast %cst_8 : f32 to vector<16x128xf32>
    %47 = arith.mulf %45, %46 : vector<16x128xf32>
    %48 = arith.mulf %47, %47 : vector<16x128xf32>
    %cst_9 = arith.constant 0.000000e+00 : f32
    %49 = vector.broadcast %cst_9 : f32 to vector<16x128xf32>
    %50 = arith.subf %49, %48 : vector<16x128xf32>
    %51 = vector.extract_strided_slice %1 {offsets = [0, 0], sizes = [1, 128], strides = [1, 1]} : vector<4x128xf32> to vector<1x128xf32>
    %52 = vector.broadcast %51 : vector<1x128xf32> to vector<16x128xf32>
    %53 = arith.mulf %50, %52 : vector<16x128xf32>
    %54 = math.exp %53 : vector<16x128xf32>
    %55 = vector.extract_strided_slice %1 {offsets = [1, 0], sizes = [1, 128], strides = [1, 1]} : vector<4x128xf32> to vector<1x128xf32>
    %56 = vector.broadcast %55 : vector<1x128xf32> to vector<16x128xf32>
    %57 = arith.mulf %56, %47 : vector<16x128xf32>
    %58 = vector.extract_strided_slice %1 {offsets = [2, 0], sizes = [1, 128], strides = [1, 1]} : vector<4x128xf32> to vector<1x128xf32>
    %59 = vector.broadcast %58 : vector<1x128xf32> to vector<16x128xf32>
    %60 = arith.addf %57, %59 : vector<16x128xf32>
    %61 = math.cos %60 : vector<16x128xf32>
    %62 = arith.mulf %54, %61 : vector<16x128xf32>
    %63 = vector.extract_strided_slice %1 {offsets = [3, 0], sizes = [1, 128], strides = [1, 1]} : vector<4x128xf32> to vector<1x128xf32>
    %64 = vector.broadcast %63 : vector<1x128xf32> to vector<16x128xf32>
    %65 = arith.mulf %62, %64 : vector<16x128xf32>
    %c0_i32_10 = arith.constant 0 : i32
    %66 = vector.broadcast %c0_i32_10 : i32 to vector<16x128xi32>
    %67 = arith.cmpi eq, %44, %66 : vector<16x128xi32>
    %68 = vector.extract_strided_slice %2 {offsets = [0, 0], sizes = [1, 128], strides = [1, 1]} : vector<4x128xf32> to vector<1x128xf32>
    %cst_11 = arith.constant 0.000000e+00 : f32
    %69 = vector.shape_cast %68 : vector<1x128xf32> to vector<1x128xf32>
    %70 = vector.broadcast %69 : vector<1x128xf32> to vector<16x128xf32>
    %71 = vector.broadcast %cst_11 : f32 to vector<16x128xf32>
    %72 = arith.select %67, %70, %71 : vector<16x128xi1>, vector<16x128xf32>
    %73 = arith.addf %65, %72 : vector<16x128xf32>
    %c15_i32_12 = arith.constant 15 : i32
    %74 = vector.broadcast %c15_i32_12 : i32 to vector<16x128xi32>
    %75 = arith.cmpi eq, %44, %74 : vector<16x128xi32>
    %76 = vector.extract_strided_slice %2 {offsets = [1, 0], sizes = [1, 128], strides = [1, 1]} : vector<4x128xf32> to vector<1x128xf32>
    %cst_13 = arith.constant 0.000000e+00 : f32
    %77 = vector.shape_cast %76 : vector<1x128xf32> to vector<1x128xf32>
    %78 = vector.broadcast %77 : vector<1x128xf32> to vector<16x128xf32>
    %79 = vector.broadcast %cst_13 : f32 to vector<16x128xf32>
    %80 = arith.select %75, %78, %79 : vector<16x128xi1>, vector<16x128xf32>
    %81 = arith.addf %73, %80 : vector<16x128xf32>
    %82 = vector.shape_cast %81 : vector<16x128xf32> to vector<16x1x128xf32>
    %83 = vector.shape_cast %40 : vector<16x128xf32> to vector<1x16x128xf32>
    %84 = vector.broadcast %82 : vector<16x1x128xf32> to vector<16x16x128xf32>
    %85 = vector.broadcast %83 : vector<1x16x128xf32> to vector<16x16x128xf32>
    %86 = arith.addf %84, %85 : vector<16x16x128xf32>
    %c0_14 = arith.constant 0 : index
    %c0_15 = arith.constant 0 : index
    %c0_16 = arith.constant 0 : index
    %87 = vector.load %arg4[%c0_14, %c0_15, %c0_16] : memref<16x16x128xf32, #tpu.memory_space<vmem>>, vector<16x16x128xf32>
    tpu.vector_store %arg4[%c0_14, %c0_15, %c0_16], %86 {strides = array<i32>} : memref<16x16x128xf32, #tpu.memory_space<vmem>>, vector<16x16x128xf32>,
    return
  }
  func.func @transform_0(%arg0: i32) -> (i32, i32) {
    %c0_i32 = arith.constant 0 : i32
    %c0_i32_0 = arith.constant 0 : i32
    %c0_i32_1 = arith.constant 0 : i32
    return %c0_i32, %c0_i32_0 : i32, i32
  }
  func.func @transform_1(%arg0: i32) -> (i32, i32) {
    %c0_i32 = arith.constant 0 : i32
    %c0_i32_0 = arith.constant 0 : i32
    %c0_i32_1 = arith.constant 0 : i32
    return %c0_i32, %c0_i32_0 : i32, i32
  }
  func.func @transform_2(%arg0: i32) -> (i32, i32) {
    %c0_i32 = arith.constant 0 : i32
    %c0_i32_0 = arith.constant 0 : i32
    %c0_i32_1 = arith.constant 0 : i32
    return %c0_i32, %c0_i32_0 : i32, i32
  }
  func.func @transform_3(%arg0: i32) -> (i32, i32, i32) {
    %c0_i32 = arith.constant 0 : i32
    %c0_i32_0 = arith.constant 0 : i32
    %c0_i32_1 = arith.constant 0 : i32
    return %arg0, %c0_i32, %c0_i32_0 : i32, i32, i32
  }
}

</mosaic_0001>

<llo_original>
// kernel: tpu_custom_call.1
$region0: #{tpu_custom_call.1}
  #allocation0 [shape = 'u32[]', space=smem, size = 0x4, offset = 0x4, fixed_abs, tag = 'smem constant byte address 0x4 - core index']
  #allocation1 [shape = 'u32[72,128]{1,0:T(1,128)}', space=vmem, size = 0x9000, scoped, tag = 'internal scratch']
  %s0 = inlined_call_operand.hbm [shape: f32[4,128], index: 0, kind: input, shape index: {}]
  %s1 = inlined_call_operand.hbm [shape: f32[4,128], index: 1, kind: input, shape index: {}]
  %s2 = inlined_call_operand.hbm [shape: f32[4,128], index: 2, kind: input, shape index: {}]
  %s3 = inlined_call_operand.hbm [shape: f32[16,16,128], index: 3, kind: output, shape index: {}]
  %s4 = sld [smem:[#allocation0]]
  $region34: #{tpu_custom_call.1} parent=0
    _
  %s6 = ssub.s32 1, %s4
  %s7 = scalar_select 0, %s6, %s4
  $region1: #{tpu_custom_call.1} parent=0
    #allocation2 [shape = 'u8[2048]{0}', space=vmem, size = 0x800, scoped, tag = 'input window, operand 0, single buffered']
    #allocation3 [shape = 's32[1]{0}', space=sflag, size = 0x4, scoped, tag = 'scoped memory for tpu_custom_call.1']
    #allocation4 [shape = 's32[1]{0}', space=sflag, size = 0x4, scoped, tag = 'scoped memory for tpu_custom_call.1']
    #allocation5 [shape = 'u8[2048]{0}', space=vmem, size = 0x800, scoped, tag = 'input window, operand 1, single buffered']
    #allocation6 [shape = 's32[1]{0}', space=sflag, size = 0x4, scoped, tag = 'scoped memory for tpu_custom_call.1']
    #allocation7 [shape = 'u8[2048]{0}', space=vmem, size = 0x800, scoped, tag = 'input window, operand 2, single buffered']
    #allocation8 [shape = 'u8[131072]{0}', space=vmem, size = 0x20000, scoped, tag = 'output window, operand 0, single buffered']
    %8 = vsyncpa [#allocation3], 0
    %9 = vsyncpa [#allocation6], 0
    %10 = vsyncpa [#allocation4], 0
    // Predicated region
    $region2: #{tpu_custom_call.1} parent=1 // pred_check
      _
    $region3: #{tpu_custom_call.1} parent=1 // pred_check_branch
      %12 = sbr.rel (0) target = $region5
    $region4: #{tpu_custom_call.1} parent=1 // pred_region
      %14 = vsyncadd [#allocation3], 0
      %s16 = sshll.u32 %s0, 4
      %s17 = int_to_ptr.hbm [resolvable:$true] %s16
      %s18 = sshll.u32 [#allocation2], 4
      %s19 = int_to_ptr.vmem [resolvable:$true] %s18
      %21 = dma.hbm_to_vmem [thread:$0]  %s17, 64, %s19, [#allocation3]
    $region5: #{tpu_custom_call.1} parent=1 // pred_fallthru
      _
    // Predicated region
    $region6: #{tpu_custom_call.1} parent=1 // pred_check
      _
    $region7: #{tpu_custom_call.1} parent=1 // pred_check_branch
      %23 = sbr.rel (0) target = $region9
    $region8: #{tpu_custom_call.1} parent=1 // pred_region
      %25 = vsyncadd [#allocation6], 0
      %s27 = sshll.u32 %s1, 4
      %s28 = int_to_ptr.hbm [resolvable:$true] %s27
      %s29 = sshll.u32 [#allocation5], 4
      %s30 = int_to_ptr.vmem [resolvable:$true] %s29
      %32 = dma.hbm_to_vmem [thread:$0]  %s28, 64, %s30, [#allocation6]
    $region9: #{tpu_custom_call.1} parent=1 // pred_fallthru
      _
    // Predicated region
    $region10: #{tpu_custom_call.1} parent=1 // pred_check
      _
    $region11: #{tpu_custom_call.1} parent=1 // pred_check_branch
      %34 = sbr.rel (0) target = $region13
    $region12: #{tpu_custom_call.1} parent=1 // pred_region
      %36 = vsyncadd [#allocation6], 0
      %s38 = sshll.u32 %s2, 4
      %s39 = int_to_ptr.hbm [resolvable:$true] %s38
      %s40 = sshll.u32 [#allocation7], 4
      %s41 = int_to_ptr.vmem [resolvable:$true] %s40
      %43 = dma.hbm_to_vmem [thread:$0]  %s39, 64, %s41, [#allocation6]
    $region13: #{tpu_custom_call.1} parent=1 // pred_fallthru
      _
    // Predicated region
    $region14: #{tpu_custom_call.1} parent=1 // pred_check
      _
    $region15: #{tpu_custom_call.1} parent=1 // pred_check_branch
      %45 = sbr.rel (0) target = $region17
    $region16: #{tpu_custom_call.1} parent=1 // pred_region
      %47 = dma.done [#allocation3], 64
    $region17: #{tpu_custom_call.1} parent=1 // pred_fallthru
      _
    // Predicated region
    $region18: #{tpu_custom_call.1} parent=1 // pred_check
      _
    $region19: #{tpu_custom_call.1} parent=1 // pred_check_branch
      %49 = sbr.rel (0) target = $region21
    $region20: #{tpu_custom_call.1} parent=1 // pred_region
      %51 = dma.done [#allocation6], 64
    $region21: #{tpu_custom_call.1} parent=1 // pred_fallthru
      _
    // Predicated region
    $region22: #{tpu_custom_call.1} parent=1 // pred_check
      _
    $region23: #{tpu_custom_call.1} parent=1 // pred_check_branch
      %53 = sbr.rel (0) target = $region25
    $region24: #{tpu_custom_call.1} parent=1 // pred_region
      %55 = dma.done [#allocation6], 64
    $region25: #{tpu_custom_call.1} parent=1 // pred_fallthru
      _
    %v56 = vld [vmem:[#allocation2] sm:$0xf]
    %v57 = vld [vmem:[#allocation5] sm:$0xf]
    %v58 = vld [vmem:[#allocation7] sm:$0xf]
    %v59 = vlaneseq
    %v60 = vshrl.u32 %v59, 7
    %v61 = vadd.s32 %v60, 8
    %v62 = vcvt.s32.f32 %v60
    %v63 = vcvt.s32.f32 %v61
    %v64 = vmul.f32 %v62, 0.06666667
    %v65 = vmul.f32 %v63, 0.06666667
    %v66 = vmul.f32 %v64, %v64
    %v67 = vmul.f32 %v65, %v65
    %v68 = vsub.f32 0.0, %v66
    %v69 = vsub.f32 0.0, %v67
    %v70 = vperm.slane %v56, 0
    %v71 = vmul.f32 %v68, %v70
    %v72 = vmul.f32 %v69, %v70
    %v73 = vmul.f32 %v71, 1.442695
    %v74 = vpow.pop %v73
    %v75 = vmul.f32 %v72, 1.442695
    %v76 = vpow.pop %v75
    %v77 = vperm.slane %v56, 1
    %v78 = vmul.f32 %v77, %v64
    %v79 = vmul.f32 %v77, %v65
    %v80 = vperm.slane %v56, 2
    %v81 = vadd.f32 %v78, %v80
    %v82 = vadd.f32 %v79, %v80
    %v83 = vand.u32 2147483647, %v81
    %vm84 = vcmp.le.f32.partialorder %v83, 0.7853982
    %vm85 = vcmp.lt.s32.totalorder %v81, 0
    %v86 = vand.u32 %v81, 2139095040
    %v87 = vshrl.u32 %v86, 23
    %v88 = vsub.s32 %v87, 127
    %v89 = vand.u32 2147483647, %v81
    %v90 = vand.u32 %v89, 8388607
    %v91 = vor.u32 %v90, 8388608
    %v92 = vsub.s32 0, %v91
    %v93 = vadd.s32 %v88, 1
    %vm94 = vcmp.gt.s32.totalorder %v93, 0
    %v95 = vsel %vm94, %v93, 0
    %v96 = vshrl.u32 %v95, 5
    %v97 = vand.u32 %v95, 31
    %v98 = vsub.s32 32, %v97
    %v99 = vshrl.u32 683565275, %v98
    %v100 = vshll.u32 683565275, %v97
    %v101 = vshrl.u32 2475754826, %v98
    %v102 = vor.u32 %v100, %v101
    %v103 = vshll.u32 2475754826, %v97
    %v104 = vshrl.u32 2131351028, %v98
    %v105 = vor.u32 %v103, %v104
    %v106 = vshll.u32 2131351028, %v97
    %v107 = vshrl.u32 2102212464, %v98
    %v108 = vor.u32 %v106, %v107
    %v109 = vshll.u32 2102212464, %v97
    %v110 = vshrl.u32 920167782, %v98
    %v111 = vor.u32 %v109, %v110
    %v112 = vshll.u32 920167782, %v97
    %v113 = vshrl.u32 1326507024, %v98
    %v114 = vor.u32 %v112, %v113
    %vm115 = vcmp.lt.s32.totalorder %v96, 1
    %vm116 = vcmp.lt.s32.totalorder %v96, 2
    %vm117 = vcmp.lt.s32.totalorder %v96, 3
    %vm118 = vcmp.lt.s32.totalorder %v96, 4
    %v119 = vsel %vm115, %v99, %v102
    %v120 = vsel %vm118, %v108, 2102212464
    %v121 = vsel %vm117, %v105, %v120
    %v122 = vsel %vm116, %v119, %v121
    %v123 = vsel %vm115, %v102, %v105
    %v124 = vsel %vm118, %v111, 920167782
    %v125 = vsel %vm117, %v108, %v124
    %v126 = vsel %vm116, %v123, %v125
    %v127 = vsel %vm115, %v105, %v108
    %v128 = vsel %vm118, %v114, 1326507024
    %v129 = vsel %vm117, %v111, %v128
    %v130 = vsel %vm116, %v127, %v129
    %v131 = vshll.u32 %v91, 8
    %v132 = vand.u32 %v131, 65535
    %v133 = vshrl.u32 %v131, 16
    %v134 = vand.u32 %v130, 65535
    %v135 = vshrl.u32 %v130, 16
    %v136 = vmul.u32 %v132, %v134
    %v137 = vmul.u32 %v132, %v135
    %v138 = vmul.u32 %v133, %v134
    %v139 = vmul.u32 %v133, %v135
    %v140 = vshll.u32 %v137, 16
    %v141 = vshrl.u32 %v137, 16
    %v142 = vshll.u32 %v138, 16
    %v143 = vshrl.u32 %v138, 16
    %vm144 = vc.u32 %v136, %v140
    %v145 = vsel %vm144, 1, 0
    %v146 = vadd.s32 %v136, %v140
    %v147 = vadd.s32 %v139, %v145
    %vm148 = vc.u32 %v146, %v142
    %v149 = vsel %vm148, 1, 0
    %v150 = vadd.s32 %v146, %v142
    %v151 = vadd.s32 %v147, %v149
    %v152 = vadd.s32 %v151, %v141
    %v153 = vadd.s32 %v152, %v143
    %v154 = vand.u32 %v131, 65535
    %v155 = vshrl.u32 %v131, 16
    %v156 = vand.u32 %v126, 65535
    %v157 = vshrl.u32 %v126, 16
    %v158 = vmul.u32 %v154, %v156
    %v159 = vmul.u32 %v154, %v157
    %v160 = vmul.u32 %v155, %v156
    %v161 = vmul.u32 %v155, %v157
    %v162 = vshll.u32 %v159, 16
    %v163 = vshrl.u32 %v159, 16
    %v164 = vshll.u32 %v160, 16
    %v165 = vshrl.u32 %v160, 16
    %vm166 = vc.u32 %v158, %v162
    %v167 = vsel %vm166, 1, 0
    %v168 = vadd.s32 %v158, %v162
    %v169 = vadd.s32 %v161, %v167
    %vm170 = vc.u32 %v168, %v164
    %v171 = vsel %vm170, 1, 0
    %v172 = vadd.s32 %v168, %v164
    %v173 = vadd.s32 %v169, %v171
    %v174 = vadd.s32 %v173, %v163
    %v175 = vadd.s32 %v174, %v165
    %v176 = vmul.u32 %v131, %v122
    %v177 = vadd.s32 %v153, %v172
    %vm178 = vc.u32 %v153, %v172
    %v179 = vadd.s32 %v175, 1
    %v180 = vsel %vm178, %v179, %v175
    %v181 = vadd.s32 %v176, %v180
    %v182 = vadd.s32 %v181, 536870912
    %v183 = vshrl.u32 %v182, 30
    %v184 = vshll.u32 %v183, 30
    %v185 = vsub.s32 %v181, %v184
    %vm186 = vcmp.lt.s32.totalorder %v185, 0
    %v187 = vsub.s32 0, %v185
    %v188 = vsel %vm186, %v187, %v185
    %v189 = vclz %v188
    %v190 = vsub.s32 %v189, 2
    %vm191 = vcmp.gt.s32.totalorder 0, %v190
    %v192 = vsel %vm191, 0, %v190
    %v193 = vsub.s32 32, %v192
    %v194 = vshll.u32 %v185, %v192
    %v195 = vshrl.u32 %v177, %v193
    %v196 = vor.u32 %v194, %v195
    %v197 = vsub.s32 4294967266, %v192
    %v198 = vadd.s32 %v197, 127
    %v199 = vshll.u32 %v198, 23
    %v200 = vor.u32 4788187, %v199
    %v201 = vand.u32 2147483647, %v200
    %v203 = vcvt.s32.f32 %v196
    %v204 = vmul.f32 %v203, %v201
    %v205 = vxor.u32 %v204, 2147483648
    %v206 = vsel %vm85, %v205, %v204
    %v207 = vsub.s32 4, %v183
    %v208 = vsel %vm85, %v207, %v183
    %v209 = vsel %vm84, %v81, %v206
    %v210 = vsel %vm84, 0, %v208
    %v211 = vmul.f32 %v209, %v209
    %v212 = vmul.f32 %v211, -0.001358992
    %v213 = vadd.f32 %v212, 0.041655596
    %v214 = vmul.f32 %v211, %v213
    %v215 = vadd.f32 %v214, -0.4999988
    %v216 = vmul.f32 %v211, %v215
    %v217 = vadd.f32 1.0, %v216
    %v218 = vmul.f32 %v209, %v209
    %v219 = vmul.f32 %v218, -0.00019511016
    %v220 = vadd.f32 %v219, 0.008332121
    %v221 = vmul.f32 %v218, %v220
    %v222 = vadd.f32 %v221, -0.16666654
    %v223 = vmul.f32 %v218, %v222
    %v224 = vadd.f32 %v223, 1.0
    %v225 = vmul.f32 %v224, %v209
    %vm226 = vweird.f32 %v81
    %v227 = vand.u32 %v210, 3
    %vm228 = vcmp.lt.s32.totalorder %v227, 2
    %vm229 = vcmp.eq.s32.totalorder %v227, 0
    %v230 = vxor.u32 %v225, 2147483648
    %v231 = vsel %vm229, %v217, %v230
    %vm232 = vcmp.eq.s32.totalorder %v227, 2
    %v233 = vxor.u32 %v217, 2147483648
    %v234 = vsel %vm232, %v233, %v225
    %v235 = vsel %vm228, %v231, %v234
    %v236 = vsel %vm226, nan, %v235
    %v237 = vand.u32 2147483647, %v82
    %vm238 = vcmp.le.f32.partialorder %v237, 0.7853982
    %vm239 = vcmp.lt.s32.totalorder %v82, 0
    %v240 = vand.u32 %v82, 2139095040
    %v241 = vshrl.u32 %v240, 23
    %v242 = vsub.s32 %v241, 127
    %v243 = vand.u32 2147483647, %v82
    %v244 = vand.u32 %v243, 8388607
    %v245 = vor.u32 %v244, 8388608
    %v246 = vsub.s32 0, %v245
    %v247 = vadd.s32 %v242, 1
    %vm248 = vcmp.gt.s32.totalorder %v247, 0
    %v249 = vsel %vm248, %v247, 0
    %v250 = vshrl.u32 %v249, 5
    %v251 = vand.u32 %v249, 31
    %v252 = vsub.s32 32, %v251
    %v253 = vshrl.u32 683565275, %v252
    %v254 = vshll.u32 683565275, %v251
    %v255 = vshrl.u32 2475754826, %v252
    %v256 = vor.u32 %v254, %v255
    %v257 = vshll.u32 2475754826, %v251
    %v258 = vshrl.u32 2131351028, %v252
    %v259 = vor.u32 %v257, %v258
    %v260 = vshll.u32 2131351028, %v251
    %v261 = vshrl.u32 2102212464, %v252
    %v262 = vor.u32 %v260, %v261
    %v263 = vshll.u32 2102212464, %v251
    %v264 = vshrl.u32 920167782, %v252
    %v265 = vor.u32 %v263, %v264
    %v266 = vshll.u32 920167782, %v251
    %v267 = vshrl.u32 1326507024, %v252
    %v268 = vor.u32 %v266, %v267
    %vm269 = vcmp.lt.s32.totalorder %v250, 1
    %vm270 = vcmp.lt.s32.totalorder %v250, 2
    %vm271 = vcmp.lt.s32.totalorder %v250, 3
    %vm272 = vcmp.lt.s32.totalorder %v250, 4
    %v273 = vsel %vm269, %v253, %v256
    %v274 = vsel %vm272, %v262, 2102212464
    %v275 = vsel %vm271, %v259, %v274
    %v276 = vsel %vm270, %v273, %v275
    %v277 = vsel %vm269, %v256, %v259
    %v278 = vsel %vm272, %v265, 920167782
    %v279 = vsel %vm271, %v262, %v278
    %v280 = vsel %vm270, %v277, %v279
    %v281 = vsel %vm269, %v259, %v262
    %v282 = vsel %vm272, %v268, 1326507024
    %v283 = vsel %vm271, %v265, %v282
    %v284 = vsel %vm270, %v281, %v283
    %v285 = vshll.u32 %v245, 8
    %v286 = vand.u32 %v285, 65535
    %v287 = vshrl.u32 %v285, 16
    %v288 = vand.u32 %v284, 65535
    %v289 = vshrl.u32 %v284, 16
    %v290 = vmul.u32 %v286, %v288
    %v291 = vmul.u32 %v286, %v289
    %v292 = vmul.u32 %v287, %v288
    %v293 = vmul.u32 %v287, %v289
    %v294 = vshll.u32 %v291, 16
    %v295 = vshrl.u32 %v291, 16
    %v296 = vshll.u32 %v292, 16
    %v297 = vshrl.u32 %v292, 16
    %vm298 = vc.u32 %v290, %v294
    %v299 = vsel %vm298, 1, 0
    %v300 = vadd.s32 %v290, %v294
    %v301 = vadd.s32 %v293, %v299
    %vm302 = vc.u32 %v300, %v296
    %v303 = vsel %vm302, 1, 0
    %v304 = vadd.s32 %v300, %v296
    %v305 = vadd.s32 %v301, %v303
    %v306 = vadd.s32 %v305, %v295
    %v307 = vadd.s32 %v306, %v297
    %v308 = vand.u32 %v285, 65535
    %v309 = vshrl.u32 %v285, 16
    %v310 = vand.u32 %v280, 65535
    %v311 = vshrl.u32 %v280, 16
    %v312 = vmul.u32 %v308, %v310
    %v313 = vmul.u32 %v308, %v311
    %v314 = vmul.u32 %v309, %v310
    %v315 = vmul.u32 %v309, %v311
    %v316 = vshll.u32 %v313, 16
    %v317 = vshrl.u32 %v313, 16
    %v318 = vshll.u32 %v314, 16
    %v319 = vshrl.u32 %v314, 16
    %vm320 = vc.u32 %v312, %v316
    %v321 = vsel %vm320, 1, 0
    %v322 = vadd.s32 %v312, %v316
    %v323 = vadd.s32 %v315, %v321
    %vm324 = vc.u32 %v322, %v318
    %v325 = vsel %vm324, 1, 0
    %v326 = vadd.s32 %v322, %v318
    %v327 = vadd.s32 %v323, %v325
    %v328 = vadd.s32 %v327, %v317
    %v329 = vadd.s32 %v328, %v319
    %v330 = vmul.u32 %v285, %v276
    %v331 = vadd.s32 %v307, %v326
    %vm332 = vc.u32 %v307, %v326
    %v333 = vadd.s32 %v329, 1
    %v334 = vsel %vm332, %v333, %v329
    %v335 = vadd.s32 %v330, %v334
    %v336 = vadd.s32 %v335, 536870912
    %v337 = vshrl.u32 %v336, 30
    %v338 = vshll.u32 %v337, 30
    %v339 = vsub.s32 %v335, %v338
    %vm340 = vcmp.lt.s32.totalorder %v339, 0
    %v341 = vsub.s32 0, %v339
    %v342 = vsel %vm340, %v341, %v339
    %v343 = vclz %v342
    %v344 = vsub.s32 %v343, 2
    %vm345 = vcmp.gt.s32.totalorder 0, %v344
    %v346 = vsel %vm345, 0, %v344
    %v347 = vsub.s32 32, %v346
    %v348 = vshll.u32 %v339, %v346
    %v349 = vshrl.u32 %v331, %v347
    %v350 = vor.u32 %v348, %v349
    %v351 = vsub.s32 4294967266, %v346
    %v352 = vadd.s32 %v351, 127
    %v353 = vshll.u32 %v352, 23
    %v354 = vor.u32 4788187, %v353
    %v355 = vand.u32 2147483647, %v354
    %v357 = vcvt.s32.f32 %v350
    %v358 = vmul.f32 %v357, %v355
    %v359 = vxor.u32 %v358, 2147483648
    %v360 = vsel %vm239, %v359, %v358
    %v361 = vsub.s32 4, %v337
    %v362 = vsel %vm239, %v361, %v337
    %v363 = vsel %vm238, %v82, %v360
    %v364 = vsel %vm238, 0, %v362
    %v365 = vmul.f32 %v363, %v363
    %v366 = vmul.f32 %v365, -0.001358992
    %v367 = vadd.f32 %v366, 0.041655596
    %v368 = vmul.f32 %v365, %v367
    %v369 = vadd.f32 %v368, -0.4999988
    %v370 = vmul.f32 %v365, %v369
    %v371 = vadd.f32 1.0, %v370
    %v372 = vmul.f32 %v363, %v363
    %v373 = vmul.f32 %v372, -0.00019511016
    %v374 = vadd.f32 %v373, 0.008332121
    %v375 = vmul.f32 %v372, %v374
    %v376 = vadd.f32 %v375, -0.16666654
    %v377 = vmul.f32 %v372, %v376
    %v378 = vadd.f32 %v377, 1.0
    %v379 = vmul.f32 %v378, %v363
    %vm380 = vweird.f32 %v82
    %v381 = vand.u32 %v364, 3
    %vm382 = vcmp.lt.s32.totalorder %v381, 2
    %vm383 = vcmp.eq.s32.totalorder %v381, 0
    %v384 = vxor.u32 %v379, 2147483648
    %v385 = vsel %vm383, %v371, %v384
    %vm386 = vcmp.eq.s32.totalorder %v381, 2
    %v387 = vxor.u32 %v371, 2147483648
    %v388 = vsel %vm386, %v387, %v379
    %v389 = vsel %vm382, %v385, %v388
    %v390 = vsel %vm380, nan, %v389
    %v391 = vmul.f32 %v74, %v236
    %v392 = vmul.f32 %v76, %v390
    %v393 = vperm.slane %v56, 3
    %v394 = vmul.f32 %v391, %v393
    %v395 = vmul.f32 %v392, %v393
    %vm396 = vcmp.eq.s32.totalorder %v60, 0
    %vm397 = vcmp.eq.s32.totalorder %v61, 0
    %v398 = vperm.slane %v58, 2
    %v399 = vsel %vm396, %v398, 0.0
    %v400 = vsel %vm397, %v398, 0.0
    %v401 = vadd.f32 %v394, %v399
    %v402 = vadd.f32 %v395, %v400
    %vm403 = vcmp.eq.s32.totalorder %v60, 15
    %vm404 = vcmp.eq.s32.totalorder %v61, 15
    %v405 = vperm.slane %v58, 3
    %v406 = vsel %vm403, %v405, 0.0
    %v407 = vsel %vm404, %v405, 0.0
    %v408 = vadd.f32 %v401, %v406
    %v409 = vadd.f32 %v402, %v407
    %s410 = smul.u32 0, 16
    %v411 = vstv %s410
    %v412 = vadd.s32 %v60, %v411
    %v413 = vadd.s32 %v61, %v411
    %v414 = vcvt.s32.f32 %v412
    %v415 = vcvt.s32.f32 %v413
    %v416 = vmul.f32 %v414, 0.06666667
    %v417 = vmul.f32 %v415, 0.06666667
    %v418 = vmul.f32 %v416, %v416
    %v419 = vmul.f32 %v417, %v417
    %v420 = vsub.f32 0.0, %v418
    %v421 = vsub.f32 0.0, %v419
    %v422 = vperm.slane %v57, 0
    %v423 = vmul.f32 %v420, %v422
    %v424 = vmul.f32 %v421, %v422
    %v425 = vmul.f32 %v423, 1.442695
    %v426 = vpow.pop %v425
    %v427 = vmul.f32 %v424, 1.442695
    %v428 = vpow.pop %v427
    %v429 = vperm.slane %v57, 1
    %v430 = vmul.f32 %v429, %v416
    %v431 = vmul.f32 %v429, %v417
    %v432 = vperm.slane %v57, 2
    %v433 = vadd.f32 %v430, %v432
    %v434 = vadd.f32 %v431, %v432
    %v435 = vand.u32 2147483647, %v433
    %vm436 = vcmp.le.f32.partialorder %v435, 0.7853982
    %vm437 = vcmp.lt.s32.totalorder %v433, 0
    %v438 = vand.u32 %v433, 2139095040
    %v439 = vshrl.u32 %v438, 23
    %v440 = vsub.s32 %v439, 127
    %v441 = vand.u32 2147483647, %v433
    %v442 = vand.u32 %v441, 8388607
    %v443 = vor.u32 %v442, 8388608
    %v444 = vsub.s32 0, %v443
    %v445 = vadd.s32 %v440, 1
    %vm446 = vcmp.gt.s32.totalorder %v445, 0
    %v447 = vsel %vm446, %v445, 0
    %v448 = vshrl.u32 %v447, 5
    %v449 = vand.u32 %v447, 31
    %v450 = vsub.s32 32, %v449
    %v451 = vshrl.u32 683565275, %v450
    %v452 = vshll.u32 683565275, %v449
    %v453 = vshrl.u32 2475754826, %v450
    %v454 = vor.u32 %v452, %v453
    %v455 = vshll.u32 2475754826, %v449
    %v456 = vshrl.u32 2131351028, %v450
    %v457 = vor.u32 %v455, %v456
    %v458 = vshll.u32 2131351028, %v449
    %v459 = vshrl.u32 2102212464, %v450
    %v460 = vor.u32 %v458, %v459
    %v461 = vshll.u32 2102212464, %v449
    %v462 = vshrl.u32 920167782, %v450
    %v463 = vor.u32 %v461, %v462
    %v464 = vshll.u32 920167782, %v449
    %v465 = vshrl.u32 1326507024, %v450
    %v466 = vor.u32 %v464, %v465
    %vm467 = vcmp.lt.s32.totalorder %v448, 1
    %vm468 = vcmp.lt.s32.totalorder %v448, 2
    %vm469 = vcmp.lt.s32.totalorder %v448, 3
    %vm470 = vcmp.lt.s32.totalorder %v448, 4
    %v471 = vsel %vm467, %v451, %v454
    %v472 = vsel %vm470, %v460, 2102212464
    %v473 = vsel %vm469, %v457, %v472
    %v474 = vsel %vm468, %v471, %v473
    %v475 = vsel %vm467, %v454, %v457
    %v476 = vsel %vm470, %v463, 920167782
    %v477 = vsel %vm469, %v460, %v476
    %v478 = vsel %vm468, %v475, %v477
    %v479 = vsel %vm467, %v457, %v460
    %v480 = vsel %vm470, %v466, 1326507024
    %v481 = vsel %vm469, %v463, %v480
    %v482 = vsel %vm468, %v479, %v481
    %v483 = vshll.u32 %v443, 8
    %v484 = vand.u32 %v483, 65535
    %v485 = vshrl.u32 %v483, 16
    %v486 = vand.u32 %v482, 65535
    %v487 = vshrl.u32 %v482, 16
    %v488 = vmul.u32 %v484, %v486
    %v489 = vmul.u32 %v484, %v487
    %v490 = vmul.u32 %v485, %v486
    %v491 = vmul.u32 %v485, %v487
    %v492 = vshll.u32 %v489, 16
    %v493 = vshrl.u32 %v489, 16
    %v494 = vshll.u32 %v490, 16
    %v495 = vshrl.u32 %v490, 16
    %vm496 = vc.u32 %v488, %v492
    %v497 = vsel %vm496, 1, 0
    %v498 = vadd.s32 %v488, %v492
    %v499 = vadd.s32 %v491, %v497
    %vm500 = vc.u32 %v498, %v494
    %v501 = vsel %vm500, 1, 0
    %v502 = vadd.s32 %v498, %v494
    %v503 = vadd.s32 %v499, %v501
    %v504 = vadd.s32 %v503, %v493
    %v505 = vadd.s32 %v504, %v495
    %v506 = vand.u32 %v483, 65535
    %v507 = vshrl.u32 %v483, 16
    %v508 = vand.u32 %v478, 65535
    %v509 = vshrl.u32 %v478, 16
    %v510 = vmul.u32 %v506, %v508
    %v511 = vmul.u32 %v506, %v509
    %v512 = vmul.u32 %v507, %v508
    %v513 = vmul.u32 %v507, %v509
    %v514 = vshll.u32 %v511, 16
    %v515 = vshrl.u32 %v511, 16
    %v516 = vshll.u32 %v512, 16
    %v517 = vshrl.u32 %v512, 16
    %vm518 = vc.u32 %v510, %v514
    %v519 = vsel %vm518, 1, 0
    %v520 = vadd.s32 %v510, %v514
    %v521 = vadd.s32 %v513, %v519
    %vm522 = vc.u32 %v520, %v516
    %v523 = vsel %vm522, 1, 0
    %v524 = vadd.s32 %v520, %v516
    %v525 = vadd.s32 %v521, %v523
    %v526 = vadd.s32 %v525, %v515
    %v527 = vadd.s32 %v526, %v517
    %v528 = vmul.u32 %v483, %v474
    %v529 = vadd.s32 %v505, %v524
    %vm530 = vc.u32 %v505, %v524
    %v531 = vadd.s32 %v527, 1
    %v532 = vsel %vm530, %v531, %v527
    %v533 = vadd.s32 %v528, %v532
    %v534 = vadd.s32 %v533, 536870912
    %v535 = vshrl.u32 %v534, 30
    %v536 = vshll.u32 %v535, 30
    %v537 = vsub.s32 %v533, %v536
    %vm538 = vcmp.lt.s32.totalorder %v537, 0
    %v539 = vsub.s32 0, %v537
    %v540 = vsel %vm538, %v539, %v537
    %v541 = vclz %v540
    %v542 = vsub.s32 %v541, 2
    %vm543 = vcmp.gt.s32.totalorder 0, %v542
    %v544 = vsel %vm543, 0, %v542
    %v545 = vsub.s32 32, %v544
    %v546 = vshll.u32 %v537, %v544
    %v547 = vshrl.u32 %v529, %v545
    %v548 = vor.u32 %v546, %v547
    %v549 = vsub.s32 4294967266, %v544
    %v550 = vadd.s32 %v549, 127
    %v551 = vshll.u32 %v550, 23
    %v552 = vor.u32 4788187, %v551
    %v553 = vand.u32 2147483647, %v552
    %v555 = vcvt.s32.f32 %v548
    %v556 = vmul.f32 %v555, %v553
    %v557 = vxor.u32 %v556, 2147483648
    %v558 = vsel %vm437, %v557, %v556
    %v559 = vsub.s32 4, %v535
    %v560 = vsel %vm437, %v559, %v535
    %v561 = vsel %vm436, %v433, %v558
    %v562 = vsel %vm436, 0, %v560
    %v563 = vmul.f32 %v561, %v561
    %v564 = vmul.f32 %v563, -0.001358992
    %v565 = vadd.f32 %v564, 0.041655596
    %v566 = vmul.f32 %v563, %v565
    %v567 = vadd.f32 %v566, -0.4999988
    %v568 = vmul.f32 %v563, %v567
    %v569 = vadd.f32 1.0, %v568
    %v570 = vmul.f32 %v561, %v561
    %v571 = vmul.f32 %v570, -0.00019511016
    %v572 = vadd.f32 %v571, 0.008332121
    %v573 = vmul.f32 %v570, %v572
    %v574 = vadd.f32 %v573, -0.16666654
    %v575 = vmul.f32 %v570, %v574
    %v576 = vadd.f32 %v575, 1.0
    %v577 = vmul.f32 %v576, %v561
    %vm578 = vweird.f32 %v433
    %v579 = vand.u32 %v562, 3
    %vm580 = vcmp.lt.s32.totalorder %v579, 2
    %vm581 = vcmp.eq.s32.totalorder %v579, 0
    %v582 = vxor.u32 %v577, 2147483648
    %v583 = vsel %vm581, %v569, %v582
    %vm584 = vcmp.eq.s32.totalorder %v579, 2
    %v585 = vxor.u32 %v569, 2147483648
    %v586 = vsel %vm584, %v585, %v577
    %v587 = vsel %vm580, %v583, %v586
    %v588 = vsel %vm578, nan, %v587
    %v589 = vand.u32 2147483647, %v434
    %vm590 = vcmp.le.f32.partialorder %v589, 0.7853982
    %vm591 = vcmp.lt.s32.totalorder %v434, 0
    %v592 = vand.u32 %v434, 2139095040
    %v593 = vshrl.u32 %v592, 23
    %v594 = vsub.s32 %v593, 127
    %v595 = vand.u32 2147483647, %v434
    %v596 = vand.u32 %v595, 8388607
    %v597 = vor.u32 %v596, 8388608
    %v598 = vsub.s32 0, %v597
    %v599 = vadd.s32 %v594, 1
    %vm600 = vcmp.gt.s32.totalorder %v599, 0
    %v601 = vsel %vm600, %v599, 0
    %v602 = vshrl.u32 %v601, 5
    %v603 = vand.u32 %v601, 31
    %v604 = vsub.s32 32, %v603
    %v605 = vshrl.u32 683565275, %v604
    %v606 = vshll.u32 683565275, %v603
    %v607 = vshrl.u32 2475754826, %v604
    %v608 = vor.u32 %v606, %v607
    %v609 = vshll.u32 2475754826, %v603
    %v610 = vshrl.u32 2131351028, %v604
    %v611 = vor.u32 %v609, %v610
    %v612 = vshll.u32 2131351028, %v603
    %v613 = vshrl.u32 2102212464, %v604
    %v614 = vor.u32 %v612, %v613
    %v615 = vshll.u32 2102212464, %v603
    %v616 = vshrl.u32 920167782, %v604
    %v617 = vor.u32 %v615, %v616
    %v618 = vshll.u32 920167782, %v603
    %v619 = vshrl.u32 1326507024, %v604
    %v620 = vor.u32 %v618, %v619
    %vm621 = vcmp.lt.s32.totalorder %v602, 1
    %vm622 = vcmp.lt.s32.totalorder %v602, 2
    %vm623 = vcmp.lt.s32.totalorder %v602, 3
    %vm624 = vcmp.lt.s32.totalorder %v602, 4
    %v625 = vsel %vm621, %v605, %v608
    %v626 = vsel %vm624, %v614, 2102212464
    %v627 = vsel %vm623, %v611, %v626
    %v628 = vsel %vm622, %v625, %v627
    %v629 = vsel %vm621, %v608, %v611
    %v630 = vsel %vm624, %v617, 920167782
    %v631 = vsel %vm623, %v614, %v630
    %v632 = vsel %vm622, %v629, %v631
    %v633 = vsel %vm621, %v611, %v614
    %v634 = vsel %vm624, %v620, 1326507024
    %v635 = vsel %vm623, %v617, %v634
    %v636 = vsel %vm622, %v633, %v635
    %v637 = vshll.u32 %v597, 8
    %v638 = vand.u32 %v637, 65535
    %v639 = vshrl.u32 %v637, 16
    %v640 = vand.u32 %v636, 65535
    %v641 = vshrl.u32 %v636, 16
    %v642 = vmul.u32 %v638, %v640
    %v643 = vmul.u32 %v638, %v641
    %v644 = vmul.u32 %v639, %v640
    %v645 = vmul.u32 %v639, %v641
    %v646 = vshll.u32 %v643, 16
    %v647 = vshrl.u32 %v643, 16
    %v648 = vshll.u32 %v644, 16
    %v649 = vshrl.u32 %v644, 16
    %vm650 = vc.u32 %v642, %v646
    %v651 = vsel %vm650, 1, 0
    %v652 = vadd.s32 %v642, %v646
    %v653 = vadd.s32 %v645, %v651
    %vm654 = vc.u32 %v652, %v648
    %v655 = vsel %vm654, 1, 0
    %v656 = vadd.s32 %v652, %v648
    %v657 = vadd.s32 %v653, %v655
    %v658 = vadd.s32 %v657, %v647
    %v659 = vadd.s32 %v658, %v649
    %v660 = vand.u32 %v637, 65535
    %v661 = vshrl.u32 %v637, 16
    %v662 = vand.u32 %v632, 65535
    %v663 = vshrl.u32 %v632, 16
    %v664 = vmul.u32 %v660, %v662
    %v665 = vmul.u32 %v660, %v663
    %v666 = vmul.u32 %v661, %v662
    %v667 = vmul.u32 %v661, %v663
    %v668 = vshll.u32 %v665, 16
    %v669 = vshrl.u32 %v665, 16
    %v670 = vshll.u32 %v666, 16
    %v671 = vshrl.u32 %v666, 16
    %vm672 = vc.u32 %v664, %v668
    %v673 = vsel %vm672, 1, 0
    %v674 = vadd.s32 %v664, %v668
    %v675 = vadd.s32 %v667, %v673
    %vm676 = vc.u32 %v674, %v670
    %v677 = vsel %vm676, 1, 0
    %v678 = vadd.s32 %v674, %v670
    %v679 = vadd.s32 %v675, %v677
    %v680 = vadd.s32 %v679, %v669
    %v681 = vadd.s32 %v680, %v671
    %v682 = vmul.u32 %v637, %v628
    %v683 = vadd.s32 %v659, %v678
    %vm684 = vc.u32 %v659, %v678
    %v685 = vadd.s32 %v681, 1
    %v686 = vsel %vm684, %v685, %v681
    %v687 = vadd.s32 %v682, %v686
    %v688 = vadd.s32 %v687, 536870912
    %v689 = vshrl.u32 %v688, 30
    %v690 = vshll.u32 %v689, 30
    %v691 = vsub.s32 %v687, %v690
    %vm692 = vcmp.lt.s32.totalorder %v691, 0
    %v693 = vsub.s32 0, %v691
    %v694 = vsel %vm692, %v693, %v691
    %v695 = vclz %v694
    %v696 = vsub.s32 %v695, 2
    %vm697 = vcmp.gt.s32.totalorder 0, %v696
    %v698 = vsel %vm697, 0, %v696
    %v699 = vsub.s32 32, %v698
    %v700 = vshll.u32 %v691, %v698
    %v701 = vshrl.u32 %v683, %v699
    %v702 = vor.u32 %v700, %v701
    %v703 = vsub.s32 4294967266, %v698
    %v704 = vadd.s32 %v703, 127
    %v705 = vshll.u32 %v704, 23
    %v706 = vor.u32 4788187, %v705
    %v707 = vand.u32 2147483647, %v706
    %v709 = vcvt.s32.f32 %v702
    %v710 = vmul.f32 %v709, %v707
    %v711 = vxor.u32 %v710, 2147483648
    %v712 = vsel %vm591, %v711, %v710
    %v713 = vsub.s32 4, %v689
    %v714 = vsel %vm591, %v713, %v689
    %v715 = vsel %vm590, %v434, %v712
    %v716 = vsel %vm590, 0, %v714
    %v717 = vmul.f32 %v715, %v715
    %v718 = vmul.f32 %v717, -0.001358992
    %v719 = vadd.f32 %v718, 0.041655596
    %v720 = vmul.f32 %v717, %v719
    %v721 = vadd.f32 %v720, -0.4999988
    %v722 = vmul.f32 %v717, %v721
    %v723 = vadd.f32 1.0, %v722
    %v724 = vmul.f32 %v715, %v715
    %v725 = vmul.f32 %v724, -0.00019511016
    %v726 = vadd.f32 %v725, 0.008332121
    %v727 = vmul.f32 %v724, %v726
    %v728 = vadd.f32 %v727, -0.16666654
    %v729 = vmul.f32 %v724, %v728
    %v730 = vadd.f32 %v729, 1.0
    %v731 = vmul.f32 %v730, %v715
    %vm732 = vweird.f32 %v434
    %v733 = vand.u32 %v716, 3
    %vm734 = vcmp.lt.s32.totalorder %v733, 2
    %vm735 = vcmp.eq.s32.totalorder %v733, 0
    %v736 = vxor.u32 %v731, 2147483648
    %v737 = vsel %vm735, %v723, %v736
    %vm738 = vcmp.eq.s32.totalorder %v733, 2
    %v739 = vxor.u32 %v723, 2147483648
    %v740 = vsel %vm738, %v739, %v731
    %v741 = vsel %vm734, %v737, %v740
    %v742 = vsel %vm732, nan, %v741
    %v743 = vmul.f32 %v426, %v588
    %v744 = vmul.f32 %v428, %v742
    %v745 = vperm.slane %v57, 3
    %v746 = vmul.f32 %v743, %v745
    %v747 = vmul.f32 %v744, %v745
    %vm748 = vcmp.eq.s32.totalorder %v412, 0
    %vm749 = vcmp.eq.s32.totalorder %v413, 0
    %v750 = vperm.slane %v58, 0
    %v751 = vsel %vm748, %v750, 0.0
    %v752 = vsel %vm749, %v750, 0.0
    %v753 = vadd.f32 %v746, %v751
    %v754 = vadd.f32 %v747, %v752
    %vm755 = vcmp.eq.s32.totalorder %v412, 15
    %vm756 = vcmp.eq.s32.totalorder %v413, 15
    %v757 = vperm.slane %v58, 1
    %v758 = vsel %vm755, %v757, 0.0
    %v759 = vsel %vm756, %v757, 0.0
    %v760 = vadd.f32 %v753, %v758
    %v761 = vadd.f32 %v754, %v759
    %v764 = vrot.slane %v760, 1
    %v765 = vrot.slane %v760, 2
    %v766 = vrot.slane %v760, 3
    %v767 = vrot.slane %v760, 4
    %v768 = vrot.slane %v760, 5
    %v769 = vrot.slane %v760, 6
    %v770 = vrot.slane %v760, 7
    %v771 = vrot.slane %v761, 1
    %v772 = vrot.slane %v761, 2
    %v773 = vrot.slane %v761, 3
    %v774 = vrot.slane %v761, 4
    %v775 = vrot.slane %v761, 5
    %v776 = vrot.slane %v761, 6
    %v777 = vrot.slane %v761, 7
    %v778 = vperm.slane %v760, 0
    %v779 = vperm.slane %v764, 0
    %v780 = vperm.slane %v765, 0
    %v781 = vperm.slane %v766, 0
    %v782 = vperm.slane %v767, 0
    %v783 = vperm.slane %v768, 0
    %v784 = vperm.slane %v769, 0
    %v785 = vperm.slane %v770, 0
    %v786 = vperm.slane %v761, 0
    %v787 = vperm.slane %v771, 0
    %v788 = vperm.slane %v772, 0
    %v789 = vperm.slane %v773, 0
    %v790 = vperm.slane %v774, 0
    %v791 = vperm.slane %v775, 0
    %v792 = vperm.slane %v776, 0
    %v793 = vperm.slane %v777, 0
    %v810 = vadd.f32 %v778, %v408
    %v811 = vadd.f32 %v778, %v409
    %v812 = vadd.f32 %v779, %v408
    %v813 = vadd.f32 %v779, %v409
    %v814 = vadd.f32 %v780, %v408
    %v815 = vadd.f32 %v780, %v409
    %v816 = vadd.f32 %v781, %v408
    %v817 = vadd.f32 %v781, %v409
    %v818 = vadd.f32 %v782, %v408
    %v819 = vadd.f32 %v782, %v409
    %v820 = vadd.f32 %v783, %v408
    %v821 = vadd.f32 %v783, %v409
    %v822 = vadd.f32 %v784, %v408
    %v823 = vadd.f32 %v784, %v409
    %v824 = vadd.f32 %v785, %v408
    %v825 = vadd.f32 %v785, %v409
    %v826 = vadd.f32 %v786, %v408
    %v827 = vadd.f32 %v786, %v409
    %v828 = vadd.f32 %v787, %v408
    %v829 = vadd.f32 %v787, %v409
    %v830 = vadd.f32 %v788, %v408
    %v831 = vadd.f32 %v788, %v409
    %v832 = vadd.f32 %v789, %v408
    %v833 = vadd.f32 %v789, %v409
    %v834 = vadd.f32 %v790, %v408
    %v835 = vadd.f32 %v790, %v409
    %v836 = vadd.f32 %v791, %v408
    %v837 = vadd.f32 %v791, %v409
    %v838 = vadd.f32 %v792, %v408
    %v839 = vadd.f32 %v792, %v409
    %v840 = vadd.f32 %v793, %v408
    %v841 = vadd.f32 %v793, %v409
    %842 = vst [vmem:[#allocation8] sm:$0xff] %v810
    %843 = vst [vmem:[#allocation8 + $0x8] sm:$0xff] %v811
    %844 = vst [vmem:[#allocation8 + $0x10] sm:$0xff] %v812
    %845 = vst [vmem:[#allocation8 + $0x18] sm:$0xff] %v813
    %846 = vst [vmem:[#allocation8 + $0x20] sm:$0xff] %v814
    %847 = vst [vmem:[#allocation8 + $0x28] sm:$0xff] %v815
    %848 = vst [vmem:[#allocation8 + $0x30] sm:$0xff] %v816
    %849 = vst [vmem:[#allocation8 + $0x38] sm:$0xff] %v817
    %850 = vst [vmem:[#allocation8 + $0x40] sm:$0xff] %v818
    %851 = vst [vmem:[#allocation8 + $0x48] sm:$0xff] %v819
    %852 = vst [vmem:[#allocation8 + $0x50] sm:$0xff] %v820
    %853 = vst [vmem:[#allocation8 + $0x58] sm:$0xff] %v821
    %854 = vst [vmem:[#allocation8 + $0x60] sm:$0xff] %v822
    %855 = vst [vmem:[#allocation8 + $0x68] sm:$0xff] %v823
    %856 = vst [vmem:[#allocation8 + $0x70] sm:$0xff] %v824
    %857 = vst [vmem:[#allocation8 + $0x78] sm:$0xff] %v825
    %858 = vst [vmem:[#allocation8 + $0x80] sm:$0xff] %v826
    %859 = vst [vmem:[#allocation8 + $0x88] sm:$0xff] %v827
    %860 = vst [vmem:[#allocation8 + $0x90] sm:$0xff] %v828
    %861 = vst [vmem:[#allocation8 + $0x98] sm:$0xff] %v829
    %862 = vst [vmem:[#allocation8 + $0xa0] sm:$0xff] %v830
    %863 = vst [vmem:[#allocation8 + $0xa8] sm:$0xff] %v831
    %864 = vst [vmem:[#allocation8 + $0xb0] sm:$0xff] %v832
    %865 = vst [vmem:[#allocation8 + $0xb8] sm:$0xff] %v833
    %866 = vst [vmem:[#allocation8 + $0xc0] sm:$0xff] %v834
    %867 = vst [vmem:[#allocation8 + $0xc8] sm:$0xff] %v835
    %868 = vst [vmem:[#allocation8 + $0xd0] sm:$0xff] %v836
    %869 = vst [vmem:[#allocation8 + $0xd8] sm:$0xff] %v837
    %870 = vst [vmem:[#allocation8 + $0xe0] sm:$0xff] %v838
    %871 = vst [vmem:[#allocation8 + $0xe8] sm:$0xff] %v839
    %872 = vst [vmem:[#allocation8 + $0xf0] sm:$0xff] %v840
    %873 = vst [vmem:[#allocation8 + $0xf8] sm:$0xff] %v841
    // Predicated region
    $region26: #{tpu_custom_call.1} parent=1 // pred_check
      _
    $region27: #{tpu_custom_call.1} parent=1 // pred_check_branch
      %875 = sbr.rel (0) target = $region29
    $region28: #{tpu_custom_call.1} parent=1 // pred_region
      %877 = vsyncadd [#allocation4], 0
      %s878 = sshll.u32 [#allocation8], 4
      %s879 = int_to_ptr.vmem [resolvable:$true] %s878
      %s880 = sshll.u32 %s3, 4
      %s881 = int_to_ptr.hbm [resolvable:$true] %s880
      %886 = dma.vmem_to_hbm [thread:$0]  %s879, 4096, %s881, [#allocation4], 128, 128, 8
    $region29: #{tpu_custom_call.1} parent=1 // pred_fallthru
      _
    // Predicated region
    $region30: #{tpu_custom_call.1} parent=1 // pred_check
      _
    $region31: #{tpu_custom_call.1} parent=1 // pred_check_branch
      %888 = sbr.rel (0) target = $region33
    $region32: #{tpu_custom_call.1} parent=1 // pred_region
      %890 = dma.done [#allocation4], 4096
    $region33: #{tpu_custom_call.1} parent=1 // pred_fallthru
      _
    %891 = vsyncpa [#allocation3], 1
    %892 = vsyncpa [#allocation6], 1
    %893 = vsyncpa [#allocation4], 1

</llo_original>
